<compile_context>
chip_gen: v7x
topology: tpu7x:2x2x1
jax: 0.10.0
libtpu: 0.0.40
codegen_flags: <defaults>
</compile_context>

<pallas_src>
import math

import jax
import jax.numpy as jnp
from jax.experimental import pallas as pl
from jax.experimental.pallas import tpu as pltpu

LANE = 128


def _round_up(x, m):
    return (x + m - 1) // m * m


def _cdiv(a, b):
    return (a + b - 1) // b


def _make_lowrank_kernel(t_dtype):
    def kernel(x_ref, a_ref, b_ref, bias_ref, o_ref, t_ref):
        k = pl.program_id(1)

        @pl.when(k == 0)
        def _():
            t_ref[...] = jnp.zeros_like(t_ref)

        # First low-rank matmul, accumulated in f32 across K tiles.
        t_ref[...] += jnp.dot(x_ref[...], a_ref[...],
                              preferred_element_type=jnp.float32)

        @pl.when(k == pl.num_programs(1) - 1)
        def _():
            # Second matmul + bias; bias_ref is (1, f_out_pad) and broadcasts
            # over the batch (sublane) axis.  A zero bias is passed when the
            # module has bias=False so one compile path covers both cases.
            out = jnp.dot(t_ref[...].astype(t_dtype), b_ref[...],
                          preferred_element_type=jnp.float32)
            o_ref[...] = (out + bias_ref[...]).astype(o_ref.dtype)

    return kernel


def lowrank_forward(x, A, B, b=None, *, block_batch=None, block_k=None):
    """out = (x @ A) @ B (+ b).  x: [batch, F_in], A: [F_in, R], B: [R, F_out]."""
    batch, in_features = x.shape
    rank = A.shape[1]
    out_features = B.shape[1]
    x_dtype = x.dtype
    x_itemsize = jnp.dtype(x_dtype).itemsize

    # Weights follow x's dtype: bf16 x -> bf16 weights (half the weight DMA,
    # native bf16 MXU path); f32 x -> f32 weights.
    w_dtype = x_dtype
    w_itemsize = jnp.dtype(w_dtype).itemsize
    t_dtype = x_dtype if x_itemsize < 4 else jnp.float32

    # Lane-dense padding of the two narrow dims (zero math cost on the MXU).
    r_pad = _round_up(rank, LANE)
    f_out_pad = _round_up(out_features, LANE)
    A_p = jnp.pad(A.astype(w_dtype), ((0, 0), (0, r_pad - rank)))
    B_p = jnp.pad(B.astype(w_dtype),
                  ((0, r_pad - rank), (0, f_out_pad - out_features)))
    if b is None:
        bias2d = jnp.zeros((1, f_out_pad), jnp.float32)
    else:
        bias2d = jnp.pad(b.astype(jnp.float32).reshape(1, out_features),
                         ((0, 0), (0, f_out_pad - out_features)))

    # --- generation-aware VMEM budget (v5e/v6e: 128 MiB/TC, v7x: 64 MiB/TC) ---
    try:
        vmem_cap = int(pltpu.get_tpu_info().vmem_capacity_bytes)
    except Exception:
        vmem_cap = 64 * 1024 * 1024                  # conservative fallback
    vmem_ceiling = vmem_cap - 8 * 1024 * 1024        # headroom under physical VMEM
    budget = (vmem_ceiling * 4) // 5

    # --- K (in_features) tiling: only when A alone would starve the batch tile.
    a_bytes = in_features * r_pad * w_itemsize
    tk = in_features
    if (block_k is not None and in_features % LANE == 0
            and block_k % LANE == 0 and in_features % block_k == 0):
        tk = int(block_k)
    elif in_features % LANE == 0 and a_bytes > budget // 4:
        tk = max(LANE, ((budget // 8) // (r_pad * w_itemsize)) // LANE * LANE)
        while in_features % tk != 0:                  # tk must divide F_in exactly
            tk -= LANE
        tk = max(tk, LANE)
    nk = in_features // tk if (tk > 0 and in_features % tk == 0) else 1
    if nk == 1:
        tk = in_features
    a_bufs = 1 if nk == 1 else 2                      # resident vs streamed over K

    # --- batch tile sizing against the per-core budget ---
    packing = max(8, 32 // x_itemsize)                # 8 f32 / 16 bf16 / 32 int8
    resident_bytes = (a_bufs * tk * r_pad * w_itemsize
                      + r_pad * f_out_pad * w_itemsize     # B  (Buffered(1))
                      + f_out_pad * 4)                      # bias (Buffered(1))
    per_row = (2 * (tk + f_out_pad) * x_itemsize      # x in / out, double-buffered
               + r_pad * 4                             # f32 accumulator scratch
               + f_out_pad * 4)                        # f32 second-dot temporary
    if block_batch is None:
        tb = max(budget - resident_bytes, 0) // max(per_row, 1)
        tb = int(min(tb, 8192, _round_up(batch, packing)))
        tb = max(packing, (tb // packing) * packing)
        # v7x has 2 TensorCores: keep >= 2 "parallel" batch tiles when possible.
        if batch > packing and _cdiv(batch, tb) < 2:
            tb = max(packing, _round_up(_cdiv(batch, 2), packing))
    else:
        tb = max(packing, _round_up(int(block_batch), packing))
        tb = min(tb, _round_up(batch, packing))

    grid = (_cdiv(batch, tb), nk)   # ragged last batch tile -> masked output store

    # Advisory cost estimate: UNPADDED flops (this call is memory-bound on x).
    flops = 2 * batch * in_features * rank + 2 * batch * rank * out_features
    bytes_accessed = (x.size * x_itemsize + A_p.size * w_itemsize
                      + B_p.size * w_itemsize + bias2d.size * 4
                      + batch * f_out_pad * x_itemsize)
    cost = pl.CostEstimate(flops=flops, transcendentals=0,
                           bytes_accessed=bytes_accessed)

    vmem_need = (2 * tb * (tk + f_out_pad) * x_itemsize
                 + resident_bytes + tb * (r_pad + f_out_pad) * 4)
    cp_kwargs = dict(dimension_semantics=("parallel", "arbitrary"))
    if vmem_need > 16 * 1024 * 1024:                  # v5e default scoped limit
        cp_kwargs["vmem_limit_bytes"] = int(
            min(max(vmem_need * 5 // 4, 16 * 1024 * 1024), vmem_ceiling))

    resident = pl.Buffered(1)
    if nk == 1:
        a_spec = pl.BlockSpec((tk, r_pad), lambda i, k: (k, 0),
                              pipeline_mode=resident)        # fully resident
    else:
        a_spec = pl.BlockSpec((tk, r_pad), lambda i, k: (k, 0))  # streamed over K

    out_padded = pl.pallas_call(
        _make_lowrank_kernel(t_dtype),
        out_shape=jax.ShapeDtypeStruct((batch, f_out_pad), x_dtype),
        grid_spec=pltpu.PrefetchScalarGridSpec(
            num_scalar_prefetch=0,
            grid=grid,
            in_specs=[
                pl.BlockSpec((tb, tk), lambda i, k: (i, k)),          # x: streamed
                a_spec,                                                # A
                pl.BlockSpec((r_pad, f_out_pad), lambda i, k: (0, 0),
                             pipeline_mode=resident),                  # B: resident
                pl.BlockSpec((1, f_out_pad), lambda i, k: (0, 0),
                             pipeline_mode=resident),                  # bias: resident
            ],
            out_specs=pl.BlockSpec((tb, f_out_pad), lambda i, k: (i, 0)),
            scratch_shapes=[pltpu.VMEM((tb, r_pad), jnp.float32)],
        ),
        compiler_params=pltpu.CompilerParams(**cp_kwargs),
        cost_estimate=cost,
    )(x, A_p, B_p, bias2d)

    if f_out_pad != out_features:
        return out_padded[:, :out_features]
    return out_padded


def init_lowrank_params(key, in_features, out_features, rank, bias=True):
    """Deterministic init mirroring nn.init.kaiming_uniform_ / uniform_ shapes."""
    kA, kB, kb = jax.random.split(key, 3)
    boundA = math.sqrt(6.0 / rank)           # wA: (in_features, rank), fan_in=rank
    boundB = math.sqrt(6.0 / out_features)   # wB: (rank, out_features), fan_in=out
    A = jax.random.uniform(kA, (in_features, rank), jnp.float32, -boundA, boundA)
    B = jax.random.uniform(kB, (rank, out_features), jnp.float32, -boundB, boundB)
    b = None
    if bias:
        b = jax.random.uniform(kb, (out_features,), jnp.float32, 0.0, 1.0)
    return A, B, b


if __name__ == "__main__":
    key = jax.random.PRNGKey(0)
    k1, k2, k3, k4, k5, k6 = jax.random.split(key, 6)

    # Case 1: small shapes matching the module (with bias), f32, single tile.
    batch, fin, fout, rank = 8, 32, 16, 4
    x = jax.random.normal(k1, (batch, fin), jnp.float32)
    A, B, b = init_lowrank_params(k2, fin, fout, rank, bias=True)
    out = jax.block_until_ready(lowrank_forward(x, A, B, b))
    ref = (x @ A) @ B + b
    assert out.shape == (batch, fout)
    assert jnp.allclose(out, ref, atol=1e-5, rtol=1e-5)

    # Case 2: ragged batch (no batch padding, masked last tile), multi-tile,
    # no bias, forced small batch tile.
    b2, fin2, fout2, rank2 = 300, 64, 48, 6
    x2 = jax.random.normal(k3, (b2, fin2), jnp.float32)
    A2, B2, _ = init_lowrank_params(k4, fin2, fout2, rank2, bias=False)
    out2 = jax.block_until_ready(
        lowrank_forward(x2, A2, B2, None, block_batch=128))
    ref2 = (x2 @ A2) @ B2
    assert out2.shape == (b2, fout2)
    assert jnp.allclose(out2, ref2, atol=1e-4, rtol=1e-4)

    # Case 3: bf16 activations + forced K-tiling over in_features
    # (2 batch tiles x 2 K tiles), with bias.
    b3, fin3, fout3, rank3 = 64, 256, 32, 8
    x3 = jax.random.normal(k5, (b3, fin3), jnp.float32).astype(jnp.bfloat16)
    A3, B3, b3b = init_lowrank_params(k6, fin3, fout3, rank3, bias=True)
    out3 = jax.block_until_ready(lowrank_forward(x3, A3, B3, b3b, block_k=128))
    ref3 = ((x3.astype(jnp.float32)
             @ A3.astype(jnp.bfloat16).astype(jnp.float32))
            @ B3.astype(jnp.bfloat16).astype(jnp.float32)) + b3b
    assert out3.shape == (b3, fout3)
    assert jnp.allclose(out3.astype(jnp.float32), ref3, atol=0.3, rtol=0.05)

    print("KERNEL_OK")
</pallas_src>

<mosaic_0001>
module attributes {stable_mosaic.version = 11 : i64} {
  func.func @kernel(%arg0: i32, %arg1: i32, %arg2: memref<8x32xf32, #tpu.memory_space<vmem>>, %arg3: memref<32x128xf32, #tpu.memory_space<vmem>>, %arg4: memref<128x128xf32, #tpu.memory_space<vmem>>, %arg5: memref<1x128xf32, #tpu.memory_space<vmem>>, %arg6: memref<8x128xf32, #tpu.memory_space<vmem>>, %arg7: memref<8x128xf32, #tpu.memory_space<vmem>>) attributes {dimension_semantics = [#tpu.dimension_semantics<parallel>, #tpu.dimension_semantics<arbitrary>], iteration_bounds = array<i64: 1, 1>, scalar_prefetch = 0 : i64, scratch_operands = 1 : i64, tpu.core_type = #tpu.core_type<tc>, window_params = [{transform_indices = @transform_0, window_bounds = array<i64: 8, 32>}, {pipeline_mode = #tpu.pipeline_mode<synchronous>, transform_indices = @transform_1, window_bounds = array<i64: 32, 128>}, {pipeline_mode = #tpu.pipeline_mode<synchronous>, transform_indices = @transform_2, window_bounds = array<i64: 128, 128>}, {pipeline_mode = #tpu.pipeline_mode<synchronous>, transform_indices = @transform_3, window_bounds = array<i64: 1, 128>}, {transform_indices = @transform_4, window_bounds = array<i64: 8, 128>}]} {
    %c0_i32 = arith.constant 0 : i32
    %0 = arith.cmpi eq, %arg1, %c0_i32 : i32
    %1 = arith.extui %0 : i1 to i32
    %c0_i32_0 = arith.constant 0 : i32
    %2 = arith.cmpi ne, %1, %c0_i32_0 : i32
    scf.if %2 {
      %cst_10 = arith.constant 0.000000e+00 : f32
      %12 = vector.broadcast %cst_10 : f32 to vector<8x128xf32>
      %c0_11 = arith.constant 0 : index
      %c0_12 = arith.constant 0 : index
      %13 = vector.load %arg7[%c0_11, %c0_12] : memref<8x128xf32, #tpu.memory_space<vmem>>, vector<8x128xf32>
      tpu.vector_store %arg7[%c0_11, %c0_12], %12 {strides = array<i32>} : memref<8x128xf32, #tpu.memory_space<vmem>>, vector<8x128xf32>,
    } else {
    }
    %c0 = arith.constant 0 : index
    %c0_1 = arith.constant 0 : index
    %3 = vector.load %arg7[%c0, %c0_1] : memref<8x128xf32, #tpu.memory_space<vmem>>, vector<8x128xf32>
    %c0_2 = arith.constant 0 : index
    %c0_3 = arith.constant 0 : index
    %4 = vector.load %arg2[%c0_2, %c0_3] : memref<8x32xf32, #tpu.memory_space<vmem>>, vector<8x32xf32>
    %c0_4 = arith.constant 0 : index
    %c0_5 = arith.constant 0 : index
    %5 = vector.load %arg3[%c0_4, %c0_5] : memref<32x128xf32, #tpu.memory_space<vmem>>, vector<32x128xf32>
    %cst = arith.constant dense<0.000000e+00> : vector<8x128xf32>
    %6 = tpu.matmul %4, %5, %cst {dimension_numbers = #tpu.dot_dimension_numbers<[1], [0], [0], [1], [0, 0, 1, 1], [], []>} : vector<8x32xf32>, vector<32x128xf32>, vector<8x128xf32> -> vector<8x128xf32>
    %7 = arith.addf %3, %6 : vector<8x128xf32>
    %c0_6 = arith.constant 0 : index
    %c0_7 = arith.constant 0 : index
    %8 = vector.load %arg7[%c0_6, %c0_7] : memref<8x128xf32, #tpu.memory_space<vmem>>, vector<8x128xf32>
    tpu.vector_store %arg7[%c0_6, %c0_7], %7 {strides = array<i32>} : memref<8x128xf32, #tpu.memory_space<vmem>>, vector<8x128xf32>,
    %c0_i32_8 = arith.constant 0 : i32
    %9 = arith.cmpi eq, %arg1, %c0_i32_8 : i32
    %10 = arith.extui %9 : i1 to i32
    %c0_i32_9 = arith.constant 0 : i32
    %11 = arith.cmpi ne, %10, %c0_i32_9 : i32
    scf.if %11 {
      %c0_10 = arith.constant 0 : index
      %c0_11 = arith.constant 0 : index
      %12 = vector.load %arg7[%c0_10, %c0_11] : memref<8x128xf32, #tpu.memory_space<vmem>>, vector<8x128xf32>
      %c0_12 = arith.constant 0 : index
      %c0_13 = arith.constant 0 : index
      %13 = vector.load %arg4[%c0_12, %c0_13] : memref<128x128xf32, #tpu.memory_space<vmem>>, vector<128x128xf32>
      %cst_14 = arith.constant dense<0.000000e+00> : vector<8x128xf32>
      %14 = tpu.matmul %12, %13, %cst_14 {dimension_numbers = #tpu.dot_dimension_numbers<[1], [0], [0], [1], [0, 0, 1, 1], [], []>} : vector<8x128xf32>, vector<128x128xf32>, vector<8x128xf32> -> vector<8x128xf32>
      %c0_15 = arith.constant 0 : index
      %c0_16 = arith.constant 0 : index
      %15 = vector.load %arg5[%c0_15, %c0_16] : memref<1x128xf32, #tpu.memory_space<vmem>>, vector<1x128xf32>
      %16 = vector.broadcast %15 : vector<1x128xf32> to vector<8x128xf32>
      %17 = arith.addf %14, %16 : vector<8x128xf32>
      %c0_17 = arith.constant 0 : index
      %c0_18 = arith.constant 0 : index
      %18 = vector.load %arg6[%c0_17, %c0_18] : memref<8x128xf32, #tpu.memory_space<vmem>>, vector<8x128xf32>
      tpu.vector_store %arg6[%c0_17, %c0_18], %17 {strides = array<i32>} : memref<8x128xf32, #tpu.memory_space<vmem>>, vector<8x128xf32>,
    } else {
    }
    return
  }
  func.func @transform_0(%arg0: i32, %arg1: i32) -> (i32, i32) {
    %c0_i32 = arith.constant 0 : i32
    return %arg0, %arg1 : i32, i32
  }
  func.func @transform_1(%arg0: i32, %arg1: i32) -> (i32, i32) {
    %c0_i32 = arith.constant 0 : i32
    %c0_i32_0 = arith.constant 0 : i32
    return %arg1, %c0_i32 : i32, i32
  }
  func.func @transform_2(%arg0: i32, %arg1: i32) -> (i32, i32) {
    %c0_i32 = arith.constant 0 : i32
    %c0_i32_0 = arith.constant 0 : i32
    %c0_i32_1 = arith.constant 0 : i32
    return %c0_i32, %c0_i32_0 : i32, i32
  }
  func.func @transform_3(%arg0: i32, %arg1: i32) -> (i32, i32) {
    %c0_i32 = arith.constant 0 : i32
    %c0_i32_0 = arith.constant 0 : i32
    %c0_i32_1 = arith.constant 0 : i32
    return %c0_i32, %c0_i32_0 : i32, i32
  }
  func.func @transform_4(%arg0: i32, %arg1: i32) -> (i32, i32) {
    %c0_i32 = arith.constant 0 : i32
    %c0_i32_0 = arith.constant 0 : i32
    return %arg0, %c0_i32 : i32, i32
  }
}

</mosaic_0001>

<llo_original>
// kernel: tpu_custom_call.1
$region0: #{tpu_custom_call.1}
  #allocation0 [shape = 'u32[]', space=smem, size = 0x4, offset = 0x4, fixed_abs, tag = 'smem constant byte address 0x4 - core index']
  #allocation1 [shape = 'u32[144,128]{1,0:T(1,128)}', space=vmem, size = 0x12000, scoped, tag = 'internal scratch']
  #allocation2 [shape = 'f32[8,128]{1,0:T(8,128)}', space=vmem, size = 0x1000, scoped, tag = 'scratch operand']
  %s0 = inlined_call_operand.hbm [shape: f32[8,32], index: 0, kind: input, shape index: {}]
  %s1 = inlined_call_operand.hbm [shape: f32[32,128], index: 1, kind: input, shape index: {}]
  %s2 = inlined_call_operand.hbm [shape: f32[128,128], index: 2, kind: input, shape index: {}]
  %s3 = inlined_call_operand.vmem [shape: f32[1,128], index: 3, kind: input, shape index: {}]
  %s4 = inlined_call_operand.hbm [shape: f32[8,128], index: 4, kind: output, shape index: {}]
  %s5 = sld [smem:[#allocation0]]
  $region46: #{tpu_custom_call.1} parent=0
    _
  %s7 = ssub.s32 1, %s5
  %s8 = scalar_select 0, %s7, %s5
  $region1: #{tpu_custom_call.1} parent=0
    #allocation3 [shape = 'u8[4096]{0}', space=vmem, size = 0x1000, scoped, tag = 'input window, operand 0, single buffered']
    #allocation4 [shape = 's32[1]{0}', space=sflag, size = 0x4, scoped, tag = 'scoped memory for tpu_custom_call.1']
    #allocation5 [shape = 's32[1]{0}', space=sflag, size = 0x4, scoped, tag = 'scoped memory for tpu_custom_call.1']
    #allocation6 [shape = 'u8[16384]{0}', space=vmem, size = 0x4000, scoped, tag = 'input window, operand 1, single buffered']
    #allocation7 [shape = 's32[1]{0}', space=sflag, size = 0x4, scoped, tag = 'scoped memory for tpu_custom_call.1']
    #allocation8 [shape = 'u8[65536]{0}', space=vmem, size = 0x10000, scoped, tag = 'input window, operand 2, single buffered']
    #allocation9 [shape = 'u8[4096]{0}', space=vmem, size = 0x1000, scoped, tag = 'output window, operand 0, single buffered']
    %9 = vsyncpa [#allocation4], 0
    %10 = vsyncpa [#allocation7], 0
    %11 = vsyncpa [#allocation5], 0
    // Predicated region
    $region2: #{tpu_custom_call.1} parent=1 // pred_check
      _
    $region3: #{tpu_custom_call.1} parent=1 // pred_check_branch
      %13 = sbr.rel (0) target = $region5
    $region4: #{tpu_custom_call.1} parent=1 // pred_region
      %s15 = ssub.s32 128, 128
      %16 = vsyncadd [#allocation4], %s15
      %s18 = sshll.u32 [#allocation3], 4
      %s19 = int_to_ptr.vmem [resolvable:$true] %s18
      %21 = dma.hbm_to_vmem [thread:$0]  %s0, 128, %s19, [#allocation4]
    $region5: #{tpu_custom_call.1} parent=1 // pred_fallthru
      _
    // Predicated region
    $region6: #{tpu_custom_call.1} parent=1 // pred_check
      _
    $region7: #{tpu_custom_call.1} parent=1 // pred_check_branch
      %23 = sbr.rel (0) target = $region9
    $region8: #{tpu_custom_call.1} parent=1 // pred_region
      %s25 = ssub.s32 512, 512
      %26 = vsyncadd [#allocation7], %s25
      %s27 = sshll.u32 [#allocation6], 4
      %s28 = int_to_ptr.vmem [resolvable:$true] %s27
      %33 = dma.hbm_to_vmem [thread:$0]  %s1, 512, %s28, [#allocation7], 128, 128, 8
    $region9: #{tpu_custom_call.1} parent=1 // pred_fallthru
      _
    // Predicated region
    $region10: #{tpu_custom_call.1} parent=1 // pred_check
      _
    $region11: #{tpu_custom_call.1} parent=1 // pred_check_branch
      %35 = sbr.rel (0) target = $region13
    $region12: #{tpu_custom_call.1} parent=1 // pred_region
      %s37 = ssub.s32 2048, 2048
      %38 = vsyncadd [#allocation7], %s37
      %s39 = sshll.u32 [#allocation8], 4
      %s40 = int_to_ptr.vmem [resolvable:$true] %s39
      %45 = dma.hbm_to_vmem [thread:$0]  %s2, 2048, %s40, [#allocation7], 128, 128, 8
    $region13: #{tpu_custom_call.1} parent=1 // pred_fallthru
      _
    // Predicated region
    $region14: #{tpu_custom_call.1} parent=1 // pred_check
      _
    $region15: #{tpu_custom_call.1} parent=1 // pred_check_branch
      %47 = sbr.rel (0) target = $region17
    $region16: #{tpu_custom_call.1} parent=1 // pred_region
      _
    $region17: #{tpu_custom_call.1} parent=1 // pred_fallthru
      _
    // Predicated region
    $region18: #{tpu_custom_call.1} parent=1 // pred_check
      _
    $region19: #{tpu_custom_call.1} parent=1 // pred_check_branch
      %49 = sbr.rel (0) target = $region21
    $region20: #{tpu_custom_call.1} parent=1 // pred_region
      %50 = dma.done [#allocation4], 128
    $region21: #{tpu_custom_call.1} parent=1 // pred_fallthru
      _
    // Predicated region
    $region22: #{tpu_custom_call.1} parent=1 // pred_check
      _
    $region23: #{tpu_custom_call.1} parent=1 // pred_check_branch
      %52 = sbr.rel (0) target = $region25
    $region24: #{tpu_custom_call.1} parent=1 // pred_region
      %53 = dma.done [#allocation7], 512
    $region25: #{tpu_custom_call.1} parent=1 // pred_fallthru
      _
    // Predicated region
    $region26: #{tpu_custom_call.1} parent=1 // pred_check
      _
    $region27: #{tpu_custom_call.1} parent=1 // pred_check_branch
      %55 = sbr.rel (0) target = $region29
    $region28: #{tpu_custom_call.1} parent=1 // pred_region
      %56 = dma.done [#allocation7], 2048
    $region29: #{tpu_custom_call.1} parent=1 // pred_fallthru
      _
    %p57 = scmp.eq.s32.totalorder 0, 0
    // Predicated region
    $region30: #{tpu_custom_call.1} parent=1 // pred_check
      %p58 = pneg %p57
    $region31: #{tpu_custom_call.1} parent=1 // pred_check_branch
      %60 = sbr.rel (%p58) target = $region33
    $region32: #{tpu_custom_call.1} parent=1 // pred_region
      %61 = vst [vmem:[#allocation2] sm:$0xff] 0.0
    $region33: #{tpu_custom_call.1} parent=1 // pred_fallthru
      _
    %v62 = vld [vmem:[#allocation2] sm:$0xff]
    %v63 = vld [vmem:[#allocation3] sm:$0xff]
    %v64 = vld [vmem:[#allocation6] sm:$0xff]
    %v65 = vld [vmem:[#allocation6 + $0x8] sm:$0xff]
    %v66 = vld [vmem:[#allocation6 + $0x10] sm:$0xff]
    %v67 = vld [vmem:[#allocation6 + $0x18] sm:$0xff]
    %vm68 = vcmask 261120
    %v70 = vsel %vm68, %v63, 0
    %72 = vmatprep.subr.mxu0 0.0
    %73 = vmatpush1.msra.mxu0 %v64
    %74 = vmatprep.subr.mxu0 0.0
    %75 = vmatpush1.msra.mxu0 %v65
    %76 = vmatprep.subr.mxu0 0.0
    %77 = vmatpush1.msra.mxu0 %v66
    %78 = vmatprep.subr.mxu0 0.0
    %79 = vmatpush1.msra.mxu0 %v67
    %80 = vmatprep.subr.mxu0 0.0
    %81 = vmatpush1.msra.mxu0 0.0
    %82 = vmatprep.subr.mxu0 0.0
    %83 = vmatpush1.msra.mxu0 0.0
    %84 = vmatprep.subr.mxu0 0.0
    %85 = vmatpush1.msra.mxu0 0.0
    %86 = vmatprep.subr.mxu0 0.0
    %87 = vmatpush1.msra.mxu0 0.0
    %88 = vmatprep.subr.mxu0 0.0
    %89 = vmatpush1.msra.mxu0 0.0
    %90 = vmatprep.subr.mxu0 0.0
    %91 = vmatpush1.msra.mxu0 0.0
    %92 = vmatprep.subr.mxu0 0.0
    %93 = vmatpush1.msra.mxu0 0.0
    %94 = vmatprep.subr.mxu0 0.0
    %95 = vmatpush1.msra.mxu0 0.0
    %96 = vmatprep.subr.mxu0 0.0
    %97 = vmatpush1.msra.mxu0 0.0
    %98 = vmatprep.subr.mxu0 0.0
    %99 = vmatpush1.msra.mxu0 0.0
    %100 = vmatprep.subr.mxu0 0.0
    %101 = vmatpush1.msra.mxu0 0.0
    %102 = vmatprep.subr.mxu0 0.0
    %103 = vmatpush1.msra.mxu0 0.0
    %104 = vmatprep.subr.mxu0 0.0
    %105 = vmatpush1.msra.mxu0 0.0
    %106 = vmatprep.subr.mxu0 0.0
    %107 = vmatpush1.msra.mxu0 0.0
    %108 = vmatprep.subr.mxu0 0.0
    %109 = vmatpush1.msra.mxu0 0.0
    %110 = vmatprep.subr.mxu0 0.0
    %111 = vmatpush1.msra.mxu0 0.0
    %112 = vmatprep.subr.mxu0 0.0
    %113 = vmatpush1.msra.mxu0 0.0
    %114 = vmatprep.subr.mxu0 0.0
    %115 = vmatpush1.msra.mxu0 0.0
    %116 = vmatprep.subr.mxu0 0.0
    %117 = vmatpush1.msra.mxu0 0.0
    %118 = vmatprep.subr.mxu0 0.0
    %119 = vmatpush1.msra.mxu0 0.0
    %120 = vmatprep.subr.mxu0 0.0
    %121 = vmatpush1.msra.mxu0 0.0
    %122 = vmatprep.subr.mxu0 0.0
    %123 = vmatpush1.msra.mxu0 0.0
    %124 = vmatprep.subr.mxu0 0.0
    %125 = vmatpush1.msra.mxu0 0.0
    %126 = vmatprep.subr.mxu0 0.0
    %127 = vmatpush1.msra.mxu0 0.0
    %128 = vmatprep.subr.mxu0 0.0
    %129 = vmatpush1.msra.mxu0 0.0
    %130 = vmatprep.subr.mxu0 0.0
    %131 = vmatpush1.msra.mxu0 0.0
    %132 = vmatprep.subr.mxu0 0.0
    %133 = vmatpush1.msra.mxu0 0.0
    %134 = vmatprep.subr.mxu0 0.0
    %135 = vmatpush1.msra.mxu0 0.0
    %136 = vmatprep.mubr.f32.mxu0 0.0
    %137 = vmatmul.mubr.f32.gmra.mrb[0].mxu0 %v70
    %v138 = vpop.f32.mrb[0].mxu0
    %v139 = vadd.f32 0.0, %v138
    %v140 = vpop.f32.mrb[0].mxu0
    %141 = vdwg.mxu0
    %v142 = vadd.f32 %v62, %v139
    %143 = vst [vmem:[#allocation2] sm:$0xff] %v142
    // Predicated region
    $region34: #{tpu_custom_call.1} parent=1 // pred_check
      %p144 = pneg %p57
    $region35: #{tpu_custom_call.1} parent=1 // pred_check_branch
      %146 = sbr.rel (%p144) target = $region37
    $region36: #{tpu_custom_call.1} parent=1 // pred_region
      %v147 = vld [vmem:[#allocation2] sm:$0xff]
      %v148 = vld [vmem:[#allocation8] sm:$0xff]
      %v149 = vld [vmem:[#allocation8 + $0x8] sm:$0xff]
      %v150 = vld [vmem:[#allocation8 + $0x10] sm:$0xff]
      %v151 = vld [vmem:[#allocation8 + $0x18] sm:$0xff]
      %v152 = vld [vmem:[#allocation8 + $0x20] sm:$0xff]
      %v153 = vld [vmem:[#allocation8 + $0x28] sm:$0xff]
      %v154 = vld [vmem:[#allocation8 + $0x30] sm:$0xff]
      %v155 = vld [vmem:[#allocation8 + $0x38] sm:$0xff]
      %v156 = vld [vmem:[#allocation8 + $0x40] sm:$0xff]
      %v157 = vld [vmem:[#allocation8 + $0x48] sm:$0xff]
      %v158 = vld [vmem:[#allocation8 + $0x50] sm:$0xff]
      %v159 = vld [vmem:[#allocation8 + $0x58] sm:$0xff]
      %v160 = vld [vmem:[#allocation8 + $0x60] sm:$0xff]
      %v161 = vld [vmem:[#allocation8 + $0x68] sm:$0xff]
      %v162 = vld [vmem:[#allocation8 + $0x70] sm:$0xff]
      %v163 = vld [vmem:[#allocation8 + $0x78] sm:$0xff]
      %v164 = vld [vmem:[%s3] sm:$0x1]
      %v166 = vlaneseq
      %v167 = vshrl.u32 %v166, 7
      %v168 = vsub.s32 0, %v167
      %v169 = vrot.slane %v164, %v168
      %171 = vmatprep.subr.mxu0 0.0
      %172 = vmatpush1.msra.mxu0 %v148
      %173 = vmatprep.subr.mxu0 0.0
      %174 = vmatpush1.msra.mxu0 %v149
      %175 = vmatprep.subr.mxu0 0.0
      %176 = vmatpush1.msra.mxu0 %v150
      %177 = vmatprep.subr.mxu0 0.0
      %178 = vmatpush1.msra.mxu0 %v151
      %179 = vmatprep.subr.mxu0 0.0
      %180 = vmatpush1.msra.mxu0 %v152
      %181 = vmatprep.subr.mxu0 0.0
      %182 = vmatpush1.msra.mxu0 %v153
      %183 = vmatprep.subr.mxu0 0.0
      %184 = vmatpush1.msra.mxu0 %v154
      %185 = vmatprep.subr.mxu0 0.0
      %186 = vmatpush1.msra.mxu0 %v155
      %187 = vmatprep.subr.mxu0 0.0
      %188 = vmatpush1.msra.mxu0 %v156
      %189 = vmatprep.subr.mxu0 0.0
      %190 = vmatpush1.msra.mxu0 %v157
      %191 = vmatprep.subr.mxu0 0.0
      %192 = vmatpush1.msra.mxu0 %v158
      %193 = vmatprep.subr.mxu0 0.0
      %194 = vmatpush1.msra.mxu0 %v159
      %195 = vmatprep.subr.mxu0 0.0
      %196 = vmatpush1.msra.mxu0 %v160
      %197 = vmatprep.subr.mxu0 0.0
      %198 = vmatpush1.msra.mxu0 %v161
      %199 = vmatprep.subr.mxu0 0.0
      %200 = vmatpush1.msra.mxu0 %v162
      %201 = vmatprep.subr.mxu0 0.0
      %202 = vmatpush1.msra.mxu0 %v163
      %203 = vmatprep.subr.mxu0 0.0
      %204 = vmatpush1.msra.mxu0 0.0
      %205 = vmatprep.subr.mxu0 0.0
      %206 = vmatpush1.msra.mxu0 0.0
      %207 = vmatprep.subr.mxu0 0.0
      %208 = vmatpush1.msra.mxu0 0.0
      %209 = vmatprep.subr.mxu0 0.0
      %210 = vmatpush1.msra.mxu0 0.0
      %211 = vmatprep.subr.mxu0 0.0
      %212 = vmatpush1.msra.mxu0 0.0
      %213 = vmatprep.subr.mxu0 0.0
      %214 = vmatpush1.msra.mxu0 0.0
      %215 = vmatprep.subr.mxu0 0.0
      %216 = vmatpush1.msra.mxu0 0.0
      %217 = vmatprep.subr.mxu0 0.0
      %218 = vmatpush1.msra.mxu0 0.0
      %219 = vmatprep.subr.mxu0 0.0
      %220 = vmatpush1.msra.mxu0 0.0
      %221 = vmatprep.subr.mxu0 0.0
      %222 = vmatpush1.msra.mxu0 0.0
      %223 = vmatprep.subr.mxu0 0.0
      %224 = vmatpush1.msra.mxu0 0.0
      %225 = vmatprep.subr.mxu0 0.0
      %226 = vmatpush1.msra.mxu0 0.0
      %227 = vmatprep.subr.mxu0 0.0
      %228 = vmatpush1.msra.mxu0 0.0
      %229 = vmatprep.subr.mxu0 0.0
      %230 = vmatpush1.msra.mxu0 0.0
      %231 = vmatprep.subr.mxu0 0.0
      %232 = vmatpush1.msra.mxu0 0.0
      %233 = vmatprep.subr.mxu0 0.0
      %234 = vmatpush1.msra.mxu0 0.0
      %235 = vmatprep.mubr.f32.mxu0 0.0
      %236 = vmatmul.mubr.f32.gmra.mrb[0].mxu0 %v147
      %v237 = vpop.f32.mrb[0].mxu0
      %v238 = vadd.f32 %v169, %v237
      %v239 = vpop.f32.mrb[0].mxu0
      %240 = vdwg.mxu0
      %241 = vst [vmem:[#allocation9] sm:$0xff] %v238
    $region37: #{tpu_custom_call.1} parent=1 // pred_fallthru
      _
    // Predicated region
    $region38: #{tpu_custom_call.1} parent=1 // pred_check
      _
    $region39: #{tpu_custom_call.1} parent=1 // pred_check_branch
      %243 = sbr.rel (0) target = $region41
    $region40: #{tpu_custom_call.1} parent=1 // pred_region
      %s245 = ssub.s32 128, 128
      %246 = vsyncadd [#allocation5], %s245
      %s248 = sshll.u32 [#allocation9], 4
      %s249 = int_to_ptr.vmem [resolvable:$true] %s248
      %251 = dma.vmem_to_hbm [thread:$0]  %s249, 128, %s4, [#allocation5]
    $region41: #{tpu_custom_call.1} parent=1 // pred_fallthru
      _
    // Predicated region
    $region42: #{tpu_custom_call.1} parent=1 // pred_check
      _
    $region43: #{tpu_custom_call.1} parent=1 // pred_check_branch
      %253 = sbr.rel (0) target = $region45
    $region44: #{tpu_custom_call.1} parent=1 // pred_region
      %254 = dma.done [#allocation5], 128
    $region45: #{tpu_custom_call.1} parent=1 // pred_fallthru
      _
    %255 = vsyncpa [#allocation4], 1
    %256 = vsyncpa [#allocation7], 1
    %257 = vsyncpa [#allocation5], 1

</llo_original>
